<compile_context>
chip_gen: v5e
topology: v5e:2x2
jax: 0.10.0
libtpu: 0.0.40
codegen_flags: <defaults>
</compile_context>

<pallas_src>
import functools
import math

import jax
import jax.numpy as jnp
from jax import lax
from jax.experimental import pallas as pl
from jax.experimental.pallas import tpu as pltpu

LANES = 128        # vreg lane width: batch elements go on the lane axis
CHUNK_ROWS = 32    # sublane rows kept register-resident per inner step (4 f32 vregs)


def _round_up(a, b):
    return ((a + b - 1) // b) * b


def hcf_kernel(w1_ref, b1_ref, w2_ref, b2_ref, x_ref, o_ref, *, compute_dtype):
    """Process one (tile_rows, 128) batch tile.

    w1_ref, b1_ref, w2_ref : SMEM (H,) f32 scalars
    b2_ref                 : SMEM (1,) f32 scalar
    x_ref, o_ref           : VMEM (tile_rows, 128) f32, batch on the lane axis
    """
    n_hidden = w1_ref.shape[0]
    tile_rows = x_ref.shape[0]
    n_chunks = tile_rows // CHUNK_ROWS

    @pl.loop(0, n_chunks)
    def _(c):
        r = pl.multiple_of(c * CHUNK_ROWS, CHUNK_ROWS)
        x = x_ref[pl.ds(r, CHUNK_ROWS), :]            # 4 vregs; stays in registers
        acc0 = jnp.full_like(x, b2_ref[0])            # fold output bias into the init

        def hidden_body(j, acc):
            # layer 1: K=1 contraction == scalar broadcast mul + add (VPU)
            pre = x * w1_ref[j] + b1_ref[j]
            # tanh on the EUP (optionally bf16 on v6e/v7x for 2x EUP throughput)
            h = jnp.tanh(pre.astype(compute_dtype)).astype(jnp.float32)
            # layer 2: weighted accumulate over hidden units (VPU)
            return acc + h * w2_ref[j]

        acc = lax.fori_loop(0, n_hidden, hidden_body, acc0,
                            unroll=n_hidden <= 64)    # grouped loop kept for large H
        o_ref[pl.ds(r, CHUNK_ROWS), :] = jnp.exp(acc)  # exp (EUP), full-lane store


def _batch_dim_semantics():
    # Plain "parallel" does not shard the grid across v7x's two TensorCores;
    # CORE_PARALLEL does.  Detect v7x from the device kind; elsewhere (single-TC
    # v5e/v6e) keep PARALLEL.
    try:
        kind = jax.devices()[0].device_kind.lower()
    except Exception:
        kind = ""
    if "v7" in kind or "7x" in kind:
        return (pltpu.CORE_PARALLEL,)
    return (pltpu.PARALLEL,)


def hcf_forward(x, w1, b1, w2, b2, *, tile_rows=4096, compute_dtype=jnp.float32):
    """HCFNet forward pass: exp(tanh(x @ w1 + b1) @ w2 + b2).

    x: (N, 1); w1: (1, H); b1: (1, H); w2: (H, 1); b2: (1, 1).  Returns (N, 1) f32.
    """
    n = x.shape[0]
    n_hidden = w1.shape[1]
    xf = jnp.asarray(x, jnp.float32).reshape(-1)
    w1f = jnp.asarray(w1, jnp.float32).reshape(-1)   # (H,)
    b1f = jnp.asarray(b1, jnp.float32).reshape(-1)   # (H,)
    w2f = jnp.asarray(w2, jnp.float32).reshape(-1)   # (H,)
    b2f = jnp.asarray(b2, jnp.float32).reshape(-1)   # (1,)

    # Lane-dense layout: batch on the 128-lane axis, rows on sublanes.
    rows_needed = pl.cdiv(n, LANES)
    # Balanced tiles: fix the number of grid steps first, then pick the smallest
    # CHUNK_ROWS-multiple tile that covers the batch (pad <= CHUNK_ROWS-1 rows).
    tile_rows = max(CHUNK_ROWS, int(tile_rows))
    num_tiles = pl.cdiv(rows_needed, tile_rows)
    tr = _round_up(pl.cdiv(rows_needed, num_tiles), CHUNK_ROWS)
    rows = num_tiles * tr
    padded = rows * LANES
    if padded != n:
        # zero padding -> exp(b2 + sum tanh(b1_j) w2_j) on pad lanes: finite, sliced off
        xf = jnp.pad(xf, (0, padded - n))
    x2 = xf.reshape(rows, LANES)

    smem = pltpu.MemorySpace.SMEM
    out2 = pl.pallas_call(
        functools.partial(hcf_kernel, compute_dtype=compute_dtype),
        out_shape=jax.ShapeDtypeStruct((rows, LANES), jnp.float32),
        grid=(num_tiles,),
        in_specs=[
            pl.BlockSpec(memory_space=smem),               # w1 (H,)  scalars
            pl.BlockSpec(memory_space=smem),               # b1 (H,)  scalars
            pl.BlockSpec(memory_space=smem),               # w2 (H,)  scalars
            pl.BlockSpec(memory_space=smem),               # b2 (1,)  scalar
            pl.BlockSpec((tr, LANES), lambda i: (i, 0)),   # x tile (VMEM, double-buffered)
        ],
        out_specs=pl.BlockSpec((tr, LANES), lambda i: (i, 0)),
        compiler_params=pltpu.CompilerParams(
            dimension_semantics=_batch_dim_semantics(),
        ),
        cost_estimate=pl.CostEstimate(
            flops=4 * padded * n_hidden,
            transcendentals=padded * (n_hidden + 1),
            bytes_accessed=8 * padded,
        ),
    )(w1f, b1f, w2f, b2f, x2)

    if padded == n:
        return out2.reshape(n, 1)                     # exact fit: no slice copy
    return out2.reshape(-1)[:n].reshape(n, 1)         # drop padded batch elements


def init_params(key, n_hidden):
    """Deterministic init. Weights: xavier normal (as in the module);
    biases: PyTorch Linear default U(-1/sqrt(fan_in), 1/sqrt(fan_in))."""
    k1, k2, k3, k4 = jax.random.split(key, 4)

    def xavier_normal(k, fan_in, fan_out):
        std = math.sqrt(2.0 / (fan_in + fan_out))
        return std * jax.random.normal(k, (fan_in, fan_out), dtype=jnp.float32)

    w1 = xavier_normal(k1, 1, n_hidden)                       # (1, H)
    bound1 = 1.0 / math.sqrt(1.0)
    b1 = jax.random.uniform(k2, (1, n_hidden), jnp.float32, -bound1, bound1)

    w2 = xavier_normal(k3, n_hidden, 1)                       # (H, 1)
    bound2 = 1.0 / math.sqrt(n_hidden)
    b2 = jax.random.uniform(k4, (1, 1), jnp.float32, -bound2, bound2)
    return w1, b1, w2, b2


if __name__ == "__main__":
    key = jax.random.PRNGKey(0)
    kp, kx1, kx2, kx3 = jax.random.split(key, 4)

    n_hidden = 32
    w1, b1, w2, b2 = init_params(kp, n_hidden)

    def ref_forward(xx):
        return jnp.exp(jnp.tanh(xx @ w1 + b1) @ w2 + b2)

    # small batch: exercises the pad + slice path on a single tile
    x_small = jax.random.normal(kx1, (8, 1), dtype=jnp.float32)
    out_small = jax.block_until_ready(hcf_forward(x_small, w1, b1, w2, b2))
    assert out_small.shape == (8, 1)
    assert jnp.allclose(out_small, ref_forward(x_small), rtol=1e-5, atol=1e-5)

    # exact-fit batch (rows * 128): exercises the no-pad / no-slice fast path
    x_fit = jax.random.normal(kx2, (4096, 1), dtype=jnp.float32)
    out_fit = jax.block_until_ready(hcf_forward(x_fit, w1, b1, w2, b2))
    assert out_fit.shape == (4096, 1)
    assert jnp.allclose(out_fit, ref_forward(x_fit), rtol=1e-5, atol=1e-5)

    # multi-step grid with balanced tiles (small tile_rows forces several grid steps)
    x_big = jax.random.normal(kx3, (8315, 1), dtype=jnp.float32)
    out_big = jax.block_until_ready(hcf_forward(x_big, w1, b1, w2, b2, tile_rows=32))
    assert out_big.shape == (8315, 1)
    assert jnp.allclose(out_big, ref_forward(x_big), rtol=1e-5, atol=1e-5)

    print("KERNEL_OK")
</pallas_src>

<mosaic_0001>
module attributes {stable_mosaic.version = 11 : i64} {
  func.func @hcf_kernel(%arg0: i32, %arg1: memref<32xf32, #tpu.memory_space<smem>>, %arg2: memref<32xf32, #tpu.memory_space<smem>>, %arg3: memref<32xf32, #tpu.memory_space<smem>>, %arg4: memref<1xf32, #tpu.memory_space<smem>>, %arg5: memref<32x128xf32, #tpu.memory_space<vmem>>, %arg6: memref<32x128xf32, #tpu.memory_space<vmem>>) attributes {dimension_semantics = [#tpu.dimension_semantics<parallel>], iteration_bounds = array<i64: 1>, scalar_prefetch = 0 : i64, scratch_operands = 0 : i64, tpu.core_type = #tpu.core_type<tc>, window_params = [{transform_indices = @transform_0, window_bounds = array<i64: 32>}, {transform_indices = @transform_1, window_bounds = array<i64: 32>}, {transform_indices = @transform_2, window_bounds = array<i64: 32>}, {transform_indices = @transform_3, window_bounds = array<i64: 1>}, {transform_indices = @transform_4, window_bounds = array<i64: 32, 128>}, {transform_indices = @transform_5, window_bounds = array<i64: 32, 128>}]} {
    %c0_i32 = arith.constant 0 : i32
    %c1_i32 = arith.constant 1 : i32
    %0 = arith.muli %c0_i32, %c1_i32 : i32
    %c0_i32_0 = arith.constant 0 : i32
    %1 = arith.addi %c0_i32_0, %0 : i32
    %c32_i32 = arith.constant 32 : i32
    %2 = arith.muli %1, %c32_i32 : i32
    %3 = tpu.assume_multiple %2, 32 : i32
    %4 = arith.index_cast %3 : i32 to index
    %c0 = arith.constant 0 : index
    %5 = vector.load %arg5[%4, %c0] : memref<32x128xf32, #tpu.memory_space<vmem>>, vector<32x128xf32>
    %c0_1 = arith.constant 0 : index
    %6 = memref.load %arg4[%c0_1] : memref<1xf32, #tpu.memory_space<smem>>
    %7 = vector.broadcast %6 : f32 to vector<32x128xf32>
    %c0_i32_2 = arith.constant 0 : i32
    %8 = arith.index_cast %c0_i32_2 : i32 to index
    %9 = memref.load %arg1[%8] : memref<32xf32, #tpu.memory_space<smem>>
    %10 = vector.broadcast %9 : f32 to vector<32x128xf32>
    %11 = arith.mulf %5, %10 : vector<32x128xf32>
    %12 = arith.index_cast %c0_i32_2 : i32 to index
    %13 = memref.load %arg2[%12] : memref<32xf32, #tpu.memory_space<smem>>
    %14 = vector.broadcast %13 : f32 to vector<32x128xf32>
    %15 = arith.addf %11, %14 : vector<32x128xf32>
    %16 = math.tanh %15 : vector<32x128xf32>
    %17 = arith.index_cast %c0_i32_2 : i32 to index
    %18 = memref.load %arg3[%17] : memref<32xf32, #tpu.memory_space<smem>>
    %19 = vector.broadcast %18 : f32 to vector<32x128xf32>
    %20 = arith.mulf %16, %19 : vector<32x128xf32>
    %21 = arith.addf %7, %20 : vector<32x128xf32>
    %c1_i32_3 = arith.constant 1 : i32
    %22 = arith.index_cast %c1_i32_3 : i32 to index
    %23 = memref.load %arg1[%22] : memref<32xf32, #tpu.memory_space<smem>>
    %24 = vector.broadcast %23 : f32 to vector<32x128xf32>
    %25 = arith.mulf %5, %24 : vector<32x128xf32>
    %26 = arith.index_cast %c1_i32_3 : i32 to index
    %27 = memref.load %arg2[%26] : memref<32xf32, #tpu.memory_space<smem>>
    %28 = vector.broadcast %27 : f32 to vector<32x128xf32>
    %29 = arith.addf %25, %28 : vector<32x128xf32>
    %30 = math.tanh %29 : vector<32x128xf32>
    %31 = arith.index_cast %c1_i32_3 : i32 to index
    %32 = memref.load %arg3[%31] : memref<32xf32, #tpu.memory_space<smem>>
    %33 = vector.broadcast %32 : f32 to vector<32x128xf32>
    %34 = arith.mulf %30, %33 : vector<32x128xf32>
    %35 = arith.addf %21, %34 : vector<32x128xf32>
    %c2_i32 = arith.constant 2 : i32
    %36 = arith.index_cast %c2_i32 : i32 to index
    %37 = memref.load %arg1[%36] : memref<32xf32, #tpu.memory_space<smem>>
    %38 = vector.broadcast %37 : f32 to vector<32x128xf32>
    %39 = arith.mulf %5, %38 : vector<32x128xf32>
    %40 = arith.index_cast %c2_i32 : i32 to index
    %41 = memref.load %arg2[%40] : memref<32xf32, #tpu.memory_space<smem>>
    %42 = vector.broadcast %41 : f32 to vector<32x128xf32>
    %43 = arith.addf %39, %42 : vector<32x128xf32>
    %44 = math.tanh %43 : vector<32x128xf32>
    %45 = arith.index_cast %c2_i32 : i32 to index
    %46 = memref.load %arg3[%45] : memref<32xf32, #tpu.memory_space<smem>>
    %47 = vector.broadcast %46 : f32 to vector<32x128xf32>
    %48 = arith.mulf %44, %47 : vector<32x128xf32>
    %49 = arith.addf %35, %48 : vector<32x128xf32>
    %c3_i32 = arith.constant 3 : i32
    %50 = arith.index_cast %c3_i32 : i32 to index
    %51 = memref.load %arg1[%50] : memref<32xf32, #tpu.memory_space<smem>>
    %52 = vector.broadcast %51 : f32 to vector<32x128xf32>
    %53 = arith.mulf %5, %52 : vector<32x128xf32>
    %54 = arith.index_cast %c3_i32 : i32 to index
    %55 = memref.load %arg2[%54] : memref<32xf32, #tpu.memory_space<smem>>
    %56 = vector.broadcast %55 : f32 to vector<32x128xf32>
    %57 = arith.addf %53, %56 : vector<32x128xf32>
    %58 = math.tanh %57 : vector<32x128xf32>
    %59 = arith.index_cast %c3_i32 : i32 to index
    %60 = memref.load %arg3[%59] : memref<32xf32, #tpu.memory_space<smem>>
    %61 = vector.broadcast %60 : f32 to vector<32x128xf32>
    %62 = arith.mulf %58, %61 : vector<32x128xf32>
    %63 = arith.addf %49, %62 : vector<32x128xf32>
    %c4_i32 = arith.constant 4 : i32
    %64 = arith.index_cast %c4_i32 : i32 to index
    %65 = memref.load %arg1[%64] : memref<32xf32, #tpu.memory_space<smem>>
    %66 = vector.broadcast %65 : f32 to vector<32x128xf32>
    %67 = arith.mulf %5, %66 : vector<32x128xf32>
    %68 = arith.index_cast %c4_i32 : i32 to index
    %69 = memref.load %arg2[%68] : memref<32xf32, #tpu.memory_space<smem>>
    %70 = vector.broadcast %69 : f32 to vector<32x128xf32>
    %71 = arith.addf %67, %70 : vector<32x128xf32>
    %72 = math.tanh %71 : vector<32x128xf32>
    %73 = arith.index_cast %c4_i32 : i32 to index
    %74 = memref.load %arg3[%73] : memref<32xf32, #tpu.memory_space<smem>>
    %75 = vector.broadcast %74 : f32 to vector<32x128xf32>
    %76 = arith.mulf %72, %75 : vector<32x128xf32>
    %77 = arith.addf %63, %76 : vector<32x128xf32>
    %c5_i32 = arith.constant 5 : i32
    %78 = arith.index_cast %c5_i32 : i32 to index
    %79 = memref.load %arg1[%78] : memref<32xf32, #tpu.memory_space<smem>>
    %80 = vector.broadcast %79 : f32 to vector<32x128xf32>
    %81 = arith.mulf %5, %80 : vector<32x128xf32>
    %82 = arith.index_cast %c5_i32 : i32 to index
    %83 = memref.load %arg2[%82] : memref<32xf32, #tpu.memory_space<smem>>
    %84 = vector.broadcast %83 : f32 to vector<32x128xf32>
    %85 = arith.addf %81, %84 : vector<32x128xf32>
    %86 = math.tanh %85 : vector<32x128xf32>
    %87 = arith.index_cast %c5_i32 : i32 to index
    %88 = memref.load %arg3[%87] : memref<32xf32, #tpu.memory_space<smem>>
    %89 = vector.broadcast %88 : f32 to vector<32x128xf32>
    %90 = arith.mulf %86, %89 : vector<32x128xf32>
    %91 = arith.addf %77, %90 : vector<32x128xf32>
    %c6_i32 = arith.constant 6 : i32
    %92 = arith.index_cast %c6_i32 : i32 to index
    %93 = memref.load %arg1[%92] : memref<32xf32, #tpu.memory_space<smem>>
    %94 = vector.broadcast %93 : f32 to vector<32x128xf32>
    %95 = arith.mulf %5, %94 : vector<32x128xf32>
    %96 = arith.index_cast %c6_i32 : i32 to index
    %97 = memref.load %arg2[%96] : memref<32xf32, #tpu.memory_space<smem>>
    %98 = vector.broadcast %97 : f32 to vector<32x128xf32>
    %99 = arith.addf %95, %98 : vector<32x128xf32>
    %100 = math.tanh %99 : vector<32x128xf32>
    %101 = arith.index_cast %c6_i32 : i32 to index
    %102 = memref.load %arg3[%101] : memref<32xf32, #tpu.memory_space<smem>>
    %103 = vector.broadcast %102 : f32 to vector<32x128xf32>
    %104 = arith.mulf %100, %103 : vector<32x128xf32>
    %105 = arith.addf %91, %104 : vector<32x128xf32>
    %c7_i32 = arith.constant 7 : i32
    %106 = arith.index_cast %c7_i32 : i32 to index
    %107 = memref.load %arg1[%106] : memref<32xf32, #tpu.memory_space<smem>>
    %108 = vector.broadcast %107 : f32 to vector<32x128xf32>
    %109 = arith.mulf %5, %108 : vector<32x128xf32>
    %110 = arith.index_cast %c7_i32 : i32 to index
    %111 = memref.load %arg2[%110] : memref<32xf32, #tpu.memory_space<smem>>
    %112 = vector.broadcast %111 : f32 to vector<32x128xf32>
    %113 = arith.addf %109, %112 : vector<32x128xf32>
    %114 = math.tanh %113 : vector<32x128xf32>
    %115 = arith.index_cast %c7_i32 : i32 to index
    %116 = memref.load %arg3[%115] : memref<32xf32, #tpu.memory_space<smem>>
    %117 = vector.broadcast %116 : f32 to vector<32x128xf32>
    %118 = arith.mulf %114, %117 : vector<32x128xf32>
    %119 = arith.addf %105, %118 : vector<32x128xf32>
    %c8_i32 = arith.constant 8 : i32
    %120 = arith.index_cast %c8_i32 : i32 to index
    %121 = memref.load %arg1[%120] : memref<32xf32, #tpu.memory_space<smem>>
    %122 = vector.broadcast %121 : f32 to vector<32x128xf32>
    %123 = arith.mulf %5, %122 : vector<32x128xf32>
    %124 = arith.index_cast %c8_i32 : i32 to index
    %125 = memref.load %arg2[%124] : memref<32xf32, #tpu.memory_space<smem>>
    %126 = vector.broadcast %125 : f32 to vector<32x128xf32>
    %127 = arith.addf %123, %126 : vector<32x128xf32>
    %128 = math.tanh %127 : vector<32x128xf32>
    %129 = arith.index_cast %c8_i32 : i32 to index
    %130 = memref.load %arg3[%129] : memref<32xf32, #tpu.memory_space<smem>>
    %131 = vector.broadcast %130 : f32 to vector<32x128xf32>
    %132 = arith.mulf %128, %131 : vector<32x128xf32>
    %133 = arith.addf %119, %132 : vector<32x128xf32>
    %c9_i32 = arith.constant 9 : i32
    %134 = arith.index_cast %c9_i32 : i32 to index
    %135 = memref.load %arg1[%134] : memref<32xf32, #tpu.memory_space<smem>>
    %136 = vector.broadcast %135 : f32 to vector<32x128xf32>
    %137 = arith.mulf %5, %136 : vector<32x128xf32>
    %138 = arith.index_cast %c9_i32 : i32 to index
    %139 = memref.load %arg2[%138] : memref<32xf32, #tpu.memory_space<smem>>
    %140 = vector.broadcast %139 : f32 to vector<32x128xf32>
    %141 = arith.addf %137, %140 : vector<32x128xf32>
    %142 = math.tanh %141 : vector<32x128xf32>
    %143 = arith.index_cast %c9_i32 : i32 to index
    %144 = memref.load %arg3[%143] : memref<32xf32, #tpu.memory_space<smem>>
    %145 = vector.broadcast %144 : f32 to vector<32x128xf32>
    %146 = arith.mulf %142, %145 : vector<32x128xf32>
    %147 = arith.addf %133, %146 : vector<32x128xf32>
    %c10_i32 = arith.constant 10 : i32
    %148 = arith.index_cast %c10_i32 : i32 to index
    %149 = memref.load %arg1[%148] : memref<32xf32, #tpu.memory_space<smem>>
    %150 = vector.broadcast %149 : f32 to vector<32x128xf32>
    %151 = arith.mulf %5, %150 : vector<32x128xf32>
    %152 = arith.index_cast %c10_i32 : i32 to index
    %153 = memref.load %arg2[%152] : memref<32xf32, #tpu.memory_space<smem>>
    %154 = vector.broadcast %153 : f32 to vector<32x128xf32>
    %155 = arith.addf %151, %154 : vector<32x128xf32>
    %156 = math.tanh %155 : vector<32x128xf32>
    %157 = arith.index_cast %c10_i32 : i32 to index
    %158 = memref.load %arg3[%157] : memref<32xf32, #tpu.memory_space<smem>>
    %159 = vector.broadcast %158 : f32 to vector<32x128xf32>
    %160 = arith.mulf %156, %159 : vector<32x128xf32>
    %161 = arith.addf %147, %160 : vector<32x128xf32>
    %c11_i32 = arith.constant 11 : i32
    %162 = arith.index_cast %c11_i32 : i32 to index
    %163 = memref.load %arg1[%162] : memref<32xf32, #tpu.memory_space<smem>>
    %164 = vector.broadcast %163 : f32 to vector<32x128xf32>
    %165 = arith.mulf %5, %164 : vector<32x128xf32>
    %166 = arith.index_cast %c11_i32 : i32 to index
    %167 = memref.load %arg2[%166] : memref<32xf32, #tpu.memory_space<smem>>
    %168 = vector.broadcast %167 : f32 to vector<32x128xf32>
    %169 = arith.addf %165, %168 : vector<32x128xf32>
    %170 = math.tanh %169 : vector<32x128xf32>
    %171 = arith.index_cast %c11_i32 : i32 to index
    %172 = memref.load %arg3[%171] : memref<32xf32, #tpu.memory_space<smem>>
    %173 = vector.broadcast %172 : f32 to vector<32x128xf32>
    %174 = arith.mulf %170, %173 : vector<32x128xf32>
    %175 = arith.addf %161, %174 : vector<32x128xf32>
    %c12_i32 = arith.constant 12 : i32
    %176 = arith.index_cast %c12_i32 : i32 to index
    %177 = memref.load %arg1[%176] : memref<32xf32, #tpu.memory_space<smem>>
    %178 = vector.broadcast %177 : f32 to vector<32x128xf32>
    %179 = arith.mulf %5, %178 : vector<32x128xf32>
    %180 = arith.index_cast %c12_i32 : i32 to index
    %181 = memref.load %arg2[%180] : memref<32xf32, #tpu.memory_space<smem>>
    %182 = vector.broadcast %181 : f32 to vector<32x128xf32>
    %183 = arith.addf %179, %182 : vector<32x128xf32>
    %184 = math.tanh %183 : vector<32x128xf32>
    %185 = arith.index_cast %c12_i32 : i32 to index
    %186 = memref.load %arg3[%185] : memref<32xf32, #tpu.memory_space<smem>>
    %187 = vector.broadcast %186 : f32 to vector<32x128xf32>
    %188 = arith.mulf %184, %187 : vector<32x128xf32>
    %189 = arith.addf %175, %188 : vector<32x128xf32>
    %c13_i32 = arith.constant 13 : i32
    %190 = arith.index_cast %c13_i32 : i32 to index
    %191 = memref.load %arg1[%190] : memref<32xf32, #tpu.memory_space<smem>>
    %192 = vector.broadcast %191 : f32 to vector<32x128xf32>
    %193 = arith.mulf %5, %192 : vector<32x128xf32>
    %194 = arith.index_cast %c13_i32 : i32 to index
    %195 = memref.load %arg2[%194] : memref<32xf32, #tpu.memory_space<smem>>
    %196 = vector.broadcast %195 : f32 to vector<32x128xf32>
    %197 = arith.addf %193, %196 : vector<32x128xf32>
    %198 = math.tanh %197 : vector<32x128xf32>
    %199 = arith.index_cast %c13_i32 : i32 to index
    %200 = memref.load %arg3[%199] : memref<32xf32, #tpu.memory_space<smem>>
    %201 = vector.broadcast %200 : f32 to vector<32x128xf32>
    %202 = arith.mulf %198, %201 : vector<32x128xf32>
    %203 = arith.addf %189, %202 : vector<32x128xf32>
    %c14_i32 = arith.constant 14 : i32
    %204 = arith.index_cast %c14_i32 : i32 to index
    %205 = memref.load %arg1[%204] : memref<32xf32, #tpu.memory_space<smem>>
    %206 = vector.broadcast %205 : f32 to vector<32x128xf32>
    %207 = arith.mulf %5, %206 : vector<32x128xf32>
    %208 = arith.index_cast %c14_i32 : i32 to index
    %209 = memref.load %arg2[%208] : memref<32xf32, #tpu.memory_space<smem>>
    %210 = vector.broadcast %209 : f32 to vector<32x128xf32>
    %211 = arith.addf %207, %210 : vector<32x128xf32>
    %212 = math.tanh %211 : vector<32x128xf32>
    %213 = arith.index_cast %c14_i32 : i32 to index
    %214 = memref.load %arg3[%213] : memref<32xf32, #tpu.memory_space<smem>>
    %215 = vector.broadcast %214 : f32 to vector<32x128xf32>
    %216 = arith.mulf %212, %215 : vector<32x128xf32>
    %217 = arith.addf %203, %216 : vector<32x128xf32>
    %c15_i32 = arith.constant 15 : i32
    %218 = arith.index_cast %c15_i32 : i32 to index
    %219 = memref.load %arg1[%218] : memref<32xf32, #tpu.memory_space<smem>>
    %220 = vector.broadcast %219 : f32 to vector<32x128xf32>
    %221 = arith.mulf %5, %220 : vector<32x128xf32>
    %222 = arith.index_cast %c15_i32 : i32 to index
    %223 = memref.load %arg2[%222] : memref<32xf32, #tpu.memory_space<smem>>
    %224 = vector.broadcast %223 : f32 to vector<32x128xf32>
    %225 = arith.addf %221, %224 : vector<32x128xf32>
    %226 = math.tanh %225 : vector<32x128xf32>
    %227 = arith.index_cast %c15_i32 : i32 to index
    %228 = memref.load %arg3[%227] : memref<32xf32, #tpu.memory_space<smem>>
    %229 = vector.broadcast %228 : f32 to vector<32x128xf32>
    %230 = arith.mulf %226, %229 : vector<32x128xf32>
    %231 = arith.addf %217, %230 : vector<32x128xf32>
    %c16_i32 = arith.constant 16 : i32
    %232 = arith.index_cast %c16_i32 : i32 to index
    %233 = memref.load %arg1[%232] : memref<32xf32, #tpu.memory_space<smem>>
    %234 = vector.broadcast %233 : f32 to vector<32x128xf32>
    %235 = arith.mulf %5, %234 : vector<32x128xf32>
    %236 = arith.index_cast %c16_i32 : i32 to index
    %237 = memref.load %arg2[%236] : memref<32xf32, #tpu.memory_space<smem>>
    %238 = vector.broadcast %237 : f32 to vector<32x128xf32>
    %239 = arith.addf %235, %238 : vector<32x128xf32>
    %240 = math.tanh %239 : vector<32x128xf32>
    %241 = arith.index_cast %c16_i32 : i32 to index
    %242 = memref.load %arg3[%241] : memref<32xf32, #tpu.memory_space<smem>>
    %243 = vector.broadcast %242 : f32 to vector<32x128xf32>
    %244 = arith.mulf %240, %243 : vector<32x128xf32>
    %245 = arith.addf %231, %244 : vector<32x128xf32>
    %c17_i32 = arith.constant 17 : i32
    %246 = arith.index_cast %c17_i32 : i32 to index
    %247 = memref.load %arg1[%246] : memref<32xf32, #tpu.memory_space<smem>>
    %248 = vector.broadcast %247 : f32 to vector<32x128xf32>
    %249 = arith.mulf %5, %248 : vector<32x128xf32>
    %250 = arith.index_cast %c17_i32 : i32 to index
    %251 = memref.load %arg2[%250] : memref<32xf32, #tpu.memory_space<smem>>
    %252 = vector.broadcast %251 : f32 to vector<32x128xf32>
    %253 = arith.addf %249, %252 : vector<32x128xf32>
    %254 = math.tanh %253 : vector<32x128xf32>
    %255 = arith.index_cast %c17_i32 : i32 to index
    %256 = memref.load %arg3[%255] : memref<32xf32, #tpu.memory_space<smem>>
    %257 = vector.broadcast %256 : f32 to vector<32x128xf32>
    %258 = arith.mulf %254, %257 : vector<32x128xf32>
    %259 = arith.addf %245, %258 : vector<32x128xf32>
    %c18_i32 = arith.constant 18 : i32
    %260 = arith.index_cast %c18_i32 : i32 to index
    %261 = memref.load %arg1[%260] : memref<32xf32, #tpu.memory_space<smem>>
    %262 = vector.broadcast %261 : f32 to vector<32x128xf32>
    %263 = arith.mulf %5, %262 : vector<32x128xf32>
    %264 = arith.index_cast %c18_i32 : i32 to index
    %265 = memref.load %arg2[%264] : memref<32xf32, #tpu.memory_space<smem>>
    %266 = vector.broadcast %265 : f32 to vector<32x128xf32>
    %267 = arith.addf %263, %266 : vector<32x128xf32>
    %268 = math.tanh %267 : vector<32x128xf32>
    %269 = arith.index_cast %c18_i32 : i32 to index
    %270 = memref.load %arg3[%269] : memref<32xf32, #tpu.memory_space<smem>>
    %271 = vector.broadcast %270 : f32 to vector<32x128xf32>
    %272 = arith.mulf %268, %271 : vector<32x128xf32>
    %273 = arith.addf %259, %272 : vector<32x128xf32>
    %c19_i32 = arith.constant 19 : i32
    %274 = arith.index_cast %c19_i32 : i32 to index
    %275 = memref.load %arg1[%274] : memref<32xf32, #tpu.memory_space<smem>>
    %276 = vector.broadcast %275 : f32 to vector<32x128xf32>
    %277 = arith.mulf %5, %276 : vector<32x128xf32>
    %278 = arith.index_cast %c19_i32 : i32 to index
    %279 = memref.load %arg2[%278] : memref<32xf32, #tpu.memory_space<smem>>
    %280 = vector.broadcast %279 : f32 to vector<32x128xf32>
    %281 = arith.addf %277, %280 : vector<32x128xf32>
    %282 = math.tanh %281 : vector<32x128xf32>
    %283 = arith.index_cast %c19_i32 : i32 to index
    %284 = memref.load %arg3[%283] : memref<32xf32, #tpu.memory_space<smem>>
    %285 = vector.broadcast %284 : f32 to vector<32x128xf32>
    %286 = arith.mulf %282, %285 : vector<32x128xf32>
    %287 = arith.addf %273, %286 : vector<32x128xf32>
    %c20_i32 = arith.constant 20 : i32
    %288 = arith.index_cast %c20_i32 : i32 to index
    %289 = memref.load %arg1[%288] : memref<32xf32, #tpu.memory_space<smem>>
    %290 = vector.broadcast %289 : f32 to vector<32x128xf32>
    %291 = arith.mulf %5, %290 : vector<32x128xf32>
    %292 = arith.index_cast %c20_i32 : i32 to index
    %293 = memref.load %arg2[%292] : memref<32xf32, #tpu.memory_space<smem>>
    %294 = vector.broadcast %293 : f32 to vector<32x128xf32>
    %295 = arith.addf %291, %294 : vector<32x128xf32>
    %296 = math.tanh %295 : vector<32x128xf32>
    %297 = arith.index_cast %c20_i32 : i32 to index
    %298 = memref.load %arg3[%297] : memref<32xf32, #tpu.memory_space<smem>>
    %299 = vector.broadcast %298 : f32 to vector<32x128xf32>
    %300 = arith.mulf %296, %299 : vector<32x128xf32>
    %301 = arith.addf %287, %300 : vector<32x128xf32>
    %c21_i32 = arith.constant 21 : i32
    %302 = arith.index_cast %c21_i32 : i32 to index
    %303 = memref.load %arg1[%302] : memref<32xf32, #tpu.memory_space<smem>>
    %304 = vector.broadcast %303 : f32 to vector<32x128xf32>
    %305 = arith.mulf %5, %304 : vector<32x128xf32>
    %306 = arith.index_cast %c21_i32 : i32 to index
    %307 = memref.load %arg2[%306] : memref<32xf32, #tpu.memory_space<smem>>
    %308 = vector.broadcast %307 : f32 to vector<32x128xf32>
    %309 = arith.addf %305, %308 : vector<32x128xf32>
    %310 = math.tanh %309 : vector<32x128xf32>
    %311 = arith.index_cast %c21_i32 : i32 to index
    %312 = memref.load %arg3[%311] : memref<32xf32, #tpu.memory_space<smem>>
    %313 = vector.broadcast %312 : f32 to vector<32x128xf32>
    %314 = arith.mulf %310, %313 : vector<32x128xf32>
    %315 = arith.addf %301, %314 : vector<32x128xf32>
    %c22_i32 = arith.constant 22 : i32
    %316 = arith.index_cast %c22_i32 : i32 to index
    %317 = memref.load %arg1[%316] : memref<32xf32, #tpu.memory_space<smem>>
    %318 = vector.broadcast %317 : f32 to vector<32x128xf32>
    %319 = arith.mulf %5, %318 : vector<32x128xf32>
    %320 = arith.index_cast %c22_i32 : i32 to index
    %321 = memref.load %arg2[%320] : memref<32xf32, #tpu.memory_space<smem>>
    %322 = vector.broadcast %321 : f32 to vector<32x128xf32>
    %323 = arith.addf %319, %322 : vector<32x128xf32>
    %324 = math.tanh %323 : vector<32x128xf32>
    %325 = arith.index_cast %c22_i32 : i32 to index
    %326 = memref.load %arg3[%325] : memref<32xf32, #tpu.memory_space<smem>>
    %327 = vector.broadcast %326 : f32 to vector<32x128xf32>
    %328 = arith.mulf %324, %327 : vector<32x128xf32>
    %329 = arith.addf %315, %328 : vector<32x128xf32>
    %c23_i32 = arith.constant 23 : i32
    %330 = arith.index_cast %c23_i32 : i32 to index
    %331 = memref.load %arg1[%330] : memref<32xf32, #tpu.memory_space<smem>>
    %332 = vector.broadcast %331 : f32 to vector<32x128xf32>
    %333 = arith.mulf %5, %332 : vector<32x128xf32>
    %334 = arith.index_cast %c23_i32 : i32 to index
    %335 = memref.load %arg2[%334] : memref<32xf32, #tpu.memory_space<smem>>
    %336 = vector.broadcast %335 : f32 to vector<32x128xf32>
    %337 = arith.addf %333, %336 : vector<32x128xf32>
    %338 = math.tanh %337 : vector<32x128xf32>
    %339 = arith.index_cast %c23_i32 : i32 to index
    %340 = memref.load %arg3[%339] : memref<32xf32, #tpu.memory_space<smem>>
    %341 = vector.broadcast %340 : f32 to vector<32x128xf32>
    %342 = arith.mulf %338, %341 : vector<32x128xf32>
    %343 = arith.addf %329, %342 : vector<32x128xf32>
    %c24_i32 = arith.constant 24 : i32
    %344 = arith.index_cast %c24_i32 : i32 to index
    %345 = memref.load %arg1[%344] : memref<32xf32, #tpu.memory_space<smem>>
    %346 = vector.broadcast %345 : f32 to vector<32x128xf32>
    %347 = arith.mulf %5, %346 : vector<32x128xf32>
    %348 = arith.index_cast %c24_i32 : i32 to index
    %349 = memref.load %arg2[%348] : memref<32xf32, #tpu.memory_space<smem>>
    %350 = vector.broadcast %349 : f32 to vector<32x128xf32>
    %351 = arith.addf %347, %350 : vector<32x128xf32>
    %352 = math.tanh %351 : vector<32x128xf32>
    %353 = arith.index_cast %c24_i32 : i32 to index
    %354 = memref.load %arg3[%353] : memref<32xf32, #tpu.memory_space<smem>>
    %355 = vector.broadcast %354 : f32 to vector<32x128xf32>
    %356 = arith.mulf %352, %355 : vector<32x128xf32>
    %357 = arith.addf %343, %356 : vector<32x128xf32>
    %c25_i32 = arith.constant 25 : i32
    %358 = arith.index_cast %c25_i32 : i32 to index
    %359 = memref.load %arg1[%358] : memref<32xf32, #tpu.memory_space<smem>>
    %360 = vector.broadcast %359 : f32 to vector<32x128xf32>
    %361 = arith.mulf %5, %360 : vector<32x128xf32>
    %362 = arith.index_cast %c25_i32 : i32 to index
    %363 = memref.load %arg2[%362] : memref<32xf32, #tpu.memory_space<smem>>
    %364 = vector.broadcast %363 : f32 to vector<32x128xf32>
    %365 = arith.addf %361, %364 : vector<32x128xf32>
    %366 = math.tanh %365 : vector<32x128xf32>
    %367 = arith.index_cast %c25_i32 : i32 to index
    %368 = memref.load %arg3[%367] : memref<32xf32, #tpu.memory_space<smem>>
    %369 = vector.broadcast %368 : f32 to vector<32x128xf32>
    %370 = arith.mulf %366, %369 : vector<32x128xf32>
    %371 = arith.addf %357, %370 : vector<32x128xf32>
    %c26_i32 = arith.constant 26 : i32
    %372 = arith.index_cast %c26_i32 : i32 to index
    %373 = memref.load %arg1[%372] : memref<32xf32, #tpu.memory_space<smem>>
    %374 = vector.broadcast %373 : f32 to vector<32x128xf32>
    %375 = arith.mulf %5, %374 : vector<32x128xf32>
    %376 = arith.index_cast %c26_i32 : i32 to index
    %377 = memref.load %arg2[%376] : memref<32xf32, #tpu.memory_space<smem>>
    %378 = vector.broadcast %377 : f32 to vector<32x128xf32>
    %379 = arith.addf %375, %378 : vector<32x128xf32>
    %380 = math.tanh %379 : vector<32x128xf32>
    %381 = arith.index_cast %c26_i32 : i32 to index
    %382 = memref.load %arg3[%381] : memref<32xf32, #tpu.memory_space<smem>>
    %383 = vector.broadcast %382 : f32 to vector<32x128xf32>
    %384 = arith.mulf %380, %383 : vector<32x128xf32>
    %385 = arith.addf %371, %384 : vector<32x128xf32>
    %c27_i32 = arith.constant 27 : i32
    %386 = arith.index_cast %c27_i32 : i32 to index
    %387 = memref.load %arg1[%386] : memref<32xf32, #tpu.memory_space<smem>>
    %388 = vector.broadcast %387 : f32 to vector<32x128xf32>
    %389 = arith.mulf %5, %388 : vector<32x128xf32>
    %390 = arith.index_cast %c27_i32 : i32 to index
    %391 = memref.load %arg2[%390] : memref<32xf32, #tpu.memory_space<smem>>
    %392 = vector.broadcast %391 : f32 to vector<32x128xf32>
    %393 = arith.addf %389, %392 : vector<32x128xf32>
    %394 = math.tanh %393 : vector<32x128xf32>
    %395 = arith.index_cast %c27_i32 : i32 to index
    %396 = memref.load %arg3[%395] : memref<32xf32, #tpu.memory_space<smem>>
    %397 = vector.broadcast %396 : f32 to vector<32x128xf32>
    %398 = arith.mulf %394, %397 : vector<32x128xf32>
    %399 = arith.addf %385, %398 : vector<32x128xf32>
    %c28_i32 = arith.constant 28 : i32
    %400 = arith.index_cast %c28_i32 : i32 to index
    %401 = memref.load %arg1[%400] : memref<32xf32, #tpu.memory_space<smem>>
    %402 = vector.broadcast %401 : f32 to vector<32x128xf32>
    %403 = arith.mulf %5, %402 : vector<32x128xf32>
    %404 = arith.index_cast %c28_i32 : i32 to index
    %405 = memref.load %arg2[%404] : memref<32xf32, #tpu.memory_space<smem>>
    %406 = vector.broadcast %405 : f32 to vector<32x128xf32>
    %407 = arith.addf %403, %406 : vector<32x128xf32>
    %408 = math.tanh %407 : vector<32x128xf32>
    %409 = arith.index_cast %c28_i32 : i32 to index
    %410 = memref.load %arg3[%409] : memref<32xf32, #tpu.memory_space<smem>>
    %411 = vector.broadcast %410 : f32 to vector<32x128xf32>
    %412 = arith.mulf %408, %411 : vector<32x128xf32>
    %413 = arith.addf %399, %412 : vector<32x128xf32>
    %c29_i32 = arith.constant 29 : i32
    %414 = arith.index_cast %c29_i32 : i32 to index
    %415 = memref.load %arg1[%414] : memref<32xf32, #tpu.memory_space<smem>>
    %416 = vector.broadcast %415 : f32 to vector<32x128xf32>
    %417 = arith.mulf %5, %416 : vector<32x128xf32>
    %418 = arith.index_cast %c29_i32 : i32 to index
    %419 = memref.load %arg2[%418] : memref<32xf32, #tpu.memory_space<smem>>
    %420 = vector.broadcast %419 : f32 to vector<32x128xf32>
    %421 = arith.addf %417, %420 : vector<32x128xf32>
    %422 = math.tanh %421 : vector<32x128xf32>
    %423 = arith.index_cast %c29_i32 : i32 to index
    %424 = memref.load %arg3[%423] : memref<32xf32, #tpu.memory_space<smem>>
    %425 = vector.broadcast %424 : f32 to vector<32x128xf32>
    %426 = arith.mulf %422, %425 : vector<32x128xf32>
    %427 = arith.addf %413, %426 : vector<32x128xf32>
    %c30_i32 = arith.constant 30 : i32
    %428 = arith.index_cast %c30_i32 : i32 to index
    %429 = memref.load %arg1[%428] : memref<32xf32, #tpu.memory_space<smem>>
    %430 = vector.broadcast %429 : f32 to vector<32x128xf32>
    %431 = arith.mulf %5, %430 : vector<32x128xf32>
    %432 = arith.index_cast %c30_i32 : i32 to index
    %433 = memref.load %arg2[%432] : memref<32xf32, #tpu.memory_space<smem>>
    %434 = vector.broadcast %433 : f32 to vector<32x128xf32>
    %435 = arith.addf %431, %434 : vector<32x128xf32>
    %436 = math.tanh %435 : vector<32x128xf32>
    %437 = arith.index_cast %c30_i32 : i32 to index
    %438 = memref.load %arg3[%437] : memref<32xf32, #tpu.memory_space<smem>>
    %439 = vector.broadcast %438 : f32 to vector<32x128xf32>
    %440 = arith.mulf %436, %439 : vector<32x128xf32>
    %441 = arith.addf %427, %440 : vector<32x128xf32>
    %c31_i32 = arith.constant 31 : i32
    %442 = arith.index_cast %c31_i32 : i32 to index
    %443 = memref.load %arg1[%442] : memref<32xf32, #tpu.memory_space<smem>>
    %444 = vector.broadcast %443 : f32 to vector<32x128xf32>
    %445 = arith.mulf %5, %444 : vector<32x128xf32>
    %446 = arith.index_cast %c31_i32 : i32 to index
    %447 = memref.load %arg2[%446] : memref<32xf32, #tpu.memory_space<smem>>
    %448 = vector.broadcast %447 : f32 to vector<32x128xf32>
    %449 = arith.addf %445, %448 : vector<32x128xf32>
    %450 = math.tanh %449 : vector<32x128xf32>
    %451 = arith.index_cast %c31_i32 : i32 to index
    %452 = memref.load %arg3[%451] : memref<32xf32, #tpu.memory_space<smem>>
    %453 = vector.broadcast %452 : f32 to vector<32x128xf32>
    %454 = arith.mulf %450, %453 : vector<32x128xf32>
    %455 = arith.addf %441, %454 : vector<32x128xf32>
    %c32_i32_4 = arith.constant 32 : i32
    %456 = math.exp %455 : vector<32x128xf32>
    %457 = arith.index_cast %3 : i32 to index
    %c0_5 = arith.constant 0 : index
    %458 = vector.load %arg6[%457, %c0_5] : memref<32x128xf32, #tpu.memory_space<vmem>>, vector<32x128xf32>
    tpu.vector_store %arg6[%457, %c0_5], %456 {strides = array<i32>} : memref<32x128xf32, #tpu.memory_space<vmem>>, vector<32x128xf32>,
    %c1_i32_6 = arith.constant 1 : i32
    return
  }
  func.func @transform_0(%arg0: i32) -> i32 {
    %c0_i32 = arith.constant 0 : i32
    %c0_i32_0 = arith.constant 0 : i32
    return %c0_i32 : i32
  }
  func.func @transform_1(%arg0: i32) -> i32 {
    %c0_i32 = arith.constant 0 : i32
    %c0_i32_0 = arith.constant 0 : i32
    return %c0_i32 : i32
  }
  func.func @transform_2(%arg0: i32) -> i32 {
    %c0_i32 = arith.constant 0 : i32
    %c0_i32_0 = arith.constant 0 : i32
    return %c0_i32 : i32
  }
  func.func @transform_3(%arg0: i32) -> i32 {
    %c0_i32 = arith.constant 0 : i32
    %c0_i32_0 = arith.constant 0 : i32
    return %c0_i32 : i32
  }
  func.func @transform_4(%arg0: i32) -> (i32, i32) {
    %c0_i32 = arith.constant 0 : i32
    %c0_i32_0 = arith.constant 0 : i32
    return %arg0, %c0_i32 : i32, i32
  }
  func.func @transform_5(%arg0: i32) -> (i32, i32) {
    %c0_i32 = arith.constant 0 : i32
    %c0_i32_0 = arith.constant 0 : i32
    return %arg0, %c0_i32 : i32, i32
  }
}

</mosaic_0001>

<llo_original>
// kernel: tpu_custom_call.1
$region0: #{tpu_custom_call.1}
  #allocation0 [shape = 'u32[]', space=smem, size = 0x4, offset = 0x4, fixed_abs, tag = 'smem constant byte address 0x4 - core index']
  #allocation1 [shape = 'u32[72,128]{1,0:T(1,128)}', space=vmem, size = 0x9000, scoped, tag = 'internal scratch']
  #allocation2 [shape = 'f32[1]{0:T(128)S(6)}', space=smem, size = 0x200, scoped, tag = 'scoped memory for tpu_custom_call.1']
  %s0 = inlined_call_operand.vmem [shape: f32[32], index: 0, kind: input, shape index: {}]
  %s1 = inlined_call_operand.vmem [shape: f32[32], index: 1, kind: input, shape index: {}]
  %s2 = inlined_call_operand.vmem [shape: f32[32], index: 2, kind: input, shape index: {}]
  %s3 = inlined_call_operand.<no memory space> [shape: f32[1], index: 3, kind: input, shape index: {}]
  %s4 = inlined_call_operand.hbm [shape: f32[32,128], index: 4, kind: input, shape index: {}]
  %s5 = inlined_call_operand.hbm [shape: f32[32,128], index: 5, kind: output, shape index: {}]
  %s6 = sld [smem:[#allocation0]]
  $region46: #{tpu_custom_call.1} parent=0
    _
  %s8 = ssub.s32 1, %s6
  %s9 = scalar_select 0, %s8, %s6
  %10 = sst [smem:[#allocation2]] %s3
  $region1: #{tpu_custom_call.1} parent=0
    #allocation3 [shape = 'u8[512]{0}', space=smem, size = 0x200, scoped, tag = 'input window, operand 0, single buffered']
    #allocation4 [shape = 's32[1]{0}', space=sflag, size = 0x4, scoped, tag = 'scoped memory for tpu_custom_call.1']
    #allocation5 [shape = 's32[1]{0}', space=sflag, size = 0x4, scoped, tag = 'scoped memory for tpu_custom_call.1']
    #allocation6 [shape = 's32[1]{0}', space=sflag, size = 0x4, scoped, tag = 'scoped memory for tpu_custom_call.1']
    #allocation7 [shape = 'u8[512]{0}', space=smem, size = 0x200, scoped, tag = 'input window, operand 1, single buffered']
    #allocation8 [shape = 's32[1]{0}', space=sflag, size = 0x4, scoped, tag = 'scoped memory for tpu_custom_call.1']
    #allocation9 [shape = 'u8[512]{0}', space=smem, size = 0x200, scoped, tag = 'input window, operand 2, single buffered']
    #allocation10 [shape = 'u8[16384]{0}', space=vmem, size = 0x4000, scoped, tag = 'input window, operand 4, single buffered']
    #allocation11 [shape = 'u8[16384]{0}', space=vmem, size = 0x4000, scoped, tag = 'output window, operand 0, single buffered']
    %11 = vsyncpa [#allocation6], 0
    %12 = vsyncpa [#allocation8], 0
    %13 = vsyncpa [#allocation4], 0
    %14 = vsyncpa [#allocation5], 0
    // Predicated region
    $region2: #{tpu_custom_call.1} parent=1 // pred_check
      _
    $region3: #{tpu_custom_call.1} parent=1 // pred_check_branch
      %16 = sbr.rel (0) target = $region5
    $region4: #{tpu_custom_call.1} parent=1 // pred_region
      %18 = vsyncadd [#allocation6], 0
      %s20 = sshll.u32 %s0, 4
      %s21 = int_to_ptr.vmem [resolvable:$true] %s20
      %23 = dma.vmem_to_smem %s21, 16, [#allocation3], [#allocation6]
    $region5: #{tpu_custom_call.1} parent=1 // pred_fallthru
      _
    // Predicated region
    $region6: #{tpu_custom_call.1} parent=1 // pred_check
      _
    $region7: #{tpu_custom_call.1} parent=1 // pred_check_branch
      %25 = sbr.rel (0) target = $region9
    $region8: #{tpu_custom_call.1} parent=1 // pred_region
      %27 = vsyncadd [#allocation8], 0
      %s29 = sshll.u32 %s1, 4
      %s30 = int_to_ptr.vmem [resolvable:$true] %s29
      %32 = dma.vmem_to_smem %s30, 16, [#allocation7], [#allocation8]
    $region9: #{tpu_custom_call.1} parent=1 // pred_fallthru
      _
    // Predicated region
    $region10: #{tpu_custom_call.1} parent=1 // pred_check
      _
    $region11: #{tpu_custom_call.1} parent=1 // pred_check_branch
      %34 = sbr.rel (0) target = $region13
    $region12: #{tpu_custom_call.1} parent=1 // pred_region
      %36 = vsyncadd [#allocation8], 0
      %s38 = sshll.u32 %s2, 4
      %s39 = int_to_ptr.vmem [resolvable:$true] %s38
      %41 = dma.vmem_to_smem %s39, 16, [#allocation9], [#allocation8]
    $region13: #{tpu_custom_call.1} parent=1 // pred_fallthru
      _
    // Predicated region
    $region14: #{tpu_custom_call.1} parent=1 // pred_check
      _
    $region15: #{tpu_custom_call.1} parent=1 // pred_check_branch
      %43 = sbr.rel (0) target = $region17
    $region16: #{tpu_custom_call.1} parent=1 // pred_region
      _
    $region17: #{tpu_custom_call.1} parent=1 // pred_fallthru
      _
    // Predicated region
    $region18: #{tpu_custom_call.1} parent=1 // pred_check
      _
    $region19: #{tpu_custom_call.1} parent=1 // pred_check_branch
      %45 = sbr.rel (0) target = $region21
    $region20: #{tpu_custom_call.1} parent=1 // pred_region
      %47 = vsyncadd [#allocation4], 0
      %s48 = sshll.u32 %s4, 4
      %s49 = int_to_ptr.hbm [resolvable:$true] %s48
      %s50 = sshll.u32 [#allocation10], 4
      %s51 = int_to_ptr.vmem [resolvable:$true] %s50
      %56 = dma.hbm_to_vmem [thread:$0]  %s49, 512, %s51, [#allocation4], 128, 128, 8
    $region21: #{tpu_custom_call.1} parent=1 // pred_fallthru
      _
    // Predicated region
    $region22: #{tpu_custom_call.1} parent=1 // pred_check
      _
    $region23: #{tpu_custom_call.1} parent=1 // pred_check_branch
      %58 = sbr.rel (0) target = $region25
    $region24: #{tpu_custom_call.1} parent=1 // pred_region
      %60 = dma.done [#allocation6], 16
    $region25: #{tpu_custom_call.1} parent=1 // pred_fallthru
      _
    // Predicated region
    $region26: #{tpu_custom_call.1} parent=1 // pred_check
      _
    $region27: #{tpu_custom_call.1} parent=1 // pred_check_branch
      %62 = sbr.rel (0) target = $region29
    $region28: #{tpu_custom_call.1} parent=1 // pred_region
      %64 = dma.done [#allocation8], 16
    $region29: #{tpu_custom_call.1} parent=1 // pred_fallthru
      _
    // Predicated region
    $region30: #{tpu_custom_call.1} parent=1 // pred_check
      _
    $region31: #{tpu_custom_call.1} parent=1 // pred_check_branch
      %66 = sbr.rel (0) target = $region33
    $region32: #{tpu_custom_call.1} parent=1 // pred_region
      %68 = dma.done [#allocation8], 16
    $region33: #{tpu_custom_call.1} parent=1 // pred_fallthru
      _
    // Predicated region
    $region34: #{tpu_custom_call.1} parent=1 // pred_check
      _
    $region35: #{tpu_custom_call.1} parent=1 // pred_check_branch
      %70 = sbr.rel (0) target = $region37
    $region36: #{tpu_custom_call.1} parent=1 // pred_region
      %72 = dma.done [#allocation4], 512
    $region37: #{tpu_custom_call.1} parent=1 // pred_fallthru
      _
    %73 = sfence
    %v74 = vld [vmem:[#allocation10] sm:$0xff]
    %v75 = vld [vmem:[#allocation10 + $0x8] sm:$0xff]
    %v76 = vld [vmem:[#allocation10 + $0x10] sm:$0xff]
    %v77 = vld [vmem:[#allocation10 + $0x18] sm:$0xff]
    %s78 = sld [smem:[#allocation2]]
    %v79 = vstv %s78
    %s80 = sld [smem:[#allocation3]]
    %v81 = vstv %s80
    %v82 = vmul.f32 %v74, %v81
    %v83 = vmul.f32 %v75, %v81
    %v84 = vmul.f32 %v76, %v81
    %v85 = vmul.f32 %v77, %v81
    %s86 = sld [smem:[#allocation7]]
    %v87 = vstv %s86
    %v88 = vadd.f32 %v82, %v87
    %v89 = vadd.f32 %v83, %v87
    %v90 = vadd.f32 %v84, %v87
    %v91 = vadd.f32 %v85, %v87
    %v92 = vtanh.pop %v88
    %v93 = vtanh.pop %v89
    %v94 = vtanh.pop %v90
    %v95 = vtanh.pop %v91
    %s96 = sld [smem:[#allocation9]]
    %v97 = vstv %s96
    %v98 = vmul.f32 %v92, %v97
    %v99 = vmul.f32 %v93, %v97
    %v100 = vmul.f32 %v94, %v97
    %v101 = vmul.f32 %v95, %v97
    %v102 = vadd.f32 %v79, %v98
    %v103 = vadd.f32 %v79, %v99
    %v104 = vadd.f32 %v79, %v100
    %v105 = vadd.f32 %v79, %v101
    %s106 = sld [smem:[#allocation3 + $0x1]]
    %v107 = vstv %s106
    %v108 = vmul.f32 %v74, %v107
    %v109 = vmul.f32 %v75, %v107
    %v110 = vmul.f32 %v76, %v107
    %v111 = vmul.f32 %v77, %v107
    %s112 = sld [smem:[#allocation7 + $0x1]]
    %v113 = vstv %s112
    %v114 = vadd.f32 %v108, %v113
    %v115 = vadd.f32 %v109, %v113
    %v116 = vadd.f32 %v110, %v113
    %v117 = vadd.f32 %v111, %v113
    %v118 = vtanh.pop %v114
    %v119 = vtanh.pop %v115
    %v120 = vtanh.pop %v116
    %v121 = vtanh.pop %v117
    %s122 = sld [smem:[#allocation9 + $0x1]]
    %v123 = vstv %s122
    %v124 = vmul.f32 %v118, %v123
    %v125 = vmul.f32 %v119, %v123
    %v126 = vmul.f32 %v120, %v123
    %v127 = vmul.f32 %v121, %v123
    %v128 = vadd.f32 %v102, %v124
    %v129 = vadd.f32 %v103, %v125
    %v130 = vadd.f32 %v104, %v126
    %v131 = vadd.f32 %v105, %v127
    %s132 = sld [smem:[#allocation3 + $0x2]]
    %v133 = vstv %s132
    %v134 = vmul.f32 %v74, %v133
    %v135 = vmul.f32 %v75, %v133
    %v136 = vmul.f32 %v76, %v133
    %v137 = vmul.f32 %v77, %v133
    %s138 = sld [smem:[#allocation7 + $0x2]]
    %v139 = vstv %s138
    %v140 = vadd.f32 %v134, %v139
    %v141 = vadd.f32 %v135, %v139
    %v142 = vadd.f32 %v136, %v139
    %v143 = vadd.f32 %v137, %v139
    %v144 = vtanh.pop %v140
    %v145 = vtanh.pop %v141
    %v146 = vtanh.pop %v142
    %v147 = vtanh.pop %v143
    %s148 = sld [smem:[#allocation9 + $0x2]]
    %v149 = vstv %s148
    %v150 = vmul.f32 %v144, %v149
    %v151 = vmul.f32 %v145, %v149
    %v152 = vmul.f32 %v146, %v149
    %v153 = vmul.f32 %v147, %v149
    %v154 = vadd.f32 %v128, %v150
    %v155 = vadd.f32 %v129, %v151
    %v156 = vadd.f32 %v130, %v152
    %v157 = vadd.f32 %v131, %v153
    %s158 = sld [smem:[#allocation3 + $0x3]]
    %v159 = vstv %s158
    %v160 = vmul.f32 %v74, %v159
    %v161 = vmul.f32 %v75, %v159
    %v162 = vmul.f32 %v76, %v159
    %v163 = vmul.f32 %v77, %v159
    %s164 = sld [smem:[#allocation7 + $0x3]]
    %v165 = vstv %s164
    %v166 = vadd.f32 %v160, %v165
    %v167 = vadd.f32 %v161, %v165
    %v168 = vadd.f32 %v162, %v165
    %v169 = vadd.f32 %v163, %v165
    %v170 = vtanh.pop %v166
    %v171 = vtanh.pop %v167
    %v172 = vtanh.pop %v168
    %v173 = vtanh.pop %v169
    %s174 = sld [smem:[#allocation9 + $0x3]]
    %v175 = vstv %s174
    %v176 = vmul.f32 %v170, %v175
    %v177 = vmul.f32 %v171, %v175
    %v178 = vmul.f32 %v172, %v175
    %v179 = vmul.f32 %v173, %v175
    %v180 = vadd.f32 %v154, %v176
    %v181 = vadd.f32 %v155, %v177
    %v182 = vadd.f32 %v156, %v178
    %v183 = vadd.f32 %v157, %v179
    %s184 = sld [smem:[#allocation3 + $0x4]]
    %v185 = vstv %s184
    %v186 = vmul.f32 %v74, %v185
    %v187 = vmul.f32 %v75, %v185
    %v188 = vmul.f32 %v76, %v185
    %v189 = vmul.f32 %v77, %v185
    %s190 = sld [smem:[#allocation7 + $0x4]]
    %v191 = vstv %s190
    %v192 = vadd.f32 %v186, %v191
    %v193 = vadd.f32 %v187, %v191
    %v194 = vadd.f32 %v188, %v191
    %v195 = vadd.f32 %v189, %v191
    %v196 = vtanh.pop %v192
    %v197 = vtanh.pop %v193
    %v198 = vtanh.pop %v194
    %v199 = vtanh.pop %v195
    %s200 = sld [smem:[#allocation9 + $0x4]]
    %v201 = vstv %s200
    %v202 = vmul.f32 %v196, %v201
    %v203 = vmul.f32 %v197, %v201
    %v204 = vmul.f32 %v198, %v201
    %v205 = vmul.f32 %v199, %v201
    %v206 = vadd.f32 %v180, %v202
    %v207 = vadd.f32 %v181, %v203
    %v208 = vadd.f32 %v182, %v204
    %v209 = vadd.f32 %v183, %v205
    %s210 = sld [smem:[#allocation3 + $0x5]]
    %v211 = vstv %s210
    %v212 = vmul.f32 %v74, %v211
    %v213 = vmul.f32 %v75, %v211
    %v214 = vmul.f32 %v76, %v211
    %v215 = vmul.f32 %v77, %v211
    %s216 = sld [smem:[#allocation7 + $0x5]]
    %v217 = vstv %s216
    %v218 = vadd.f32 %v212, %v217
    %v219 = vadd.f32 %v213, %v217
    %v220 = vadd.f32 %v214, %v217
    %v221 = vadd.f32 %v215, %v217
    %v222 = vtanh.pop %v218
    %v223 = vtanh.pop %v219
    %v224 = vtanh.pop %v220
    %v225 = vtanh.pop %v221
    %s226 = sld [smem:[#allocation9 + $0x5]]
    %v227 = vstv %s226
    %v228 = vmul.f32 %v222, %v227
    %v229 = vmul.f32 %v223, %v227
    %v230 = vmul.f32 %v224, %v227
    %v231 = vmul.f32 %v225, %v227
    %v232 = vadd.f32 %v206, %v228
    %v233 = vadd.f32 %v207, %v229
    %v234 = vadd.f32 %v208, %v230
    %v235 = vadd.f32 %v209, %v231
    %s236 = sld [smem:[#allocation3 + $0x6]]
    %v237 = vstv %s236
    %v238 = vmul.f32 %v74, %v237
    %v239 = vmul.f32 %v75, %v237
    %v240 = vmul.f32 %v76, %v237
    %v241 = vmul.f32 %v77, %v237
    %s242 = sld [smem:[#allocation7 + $0x6]]
    %v243 = vstv %s242
    %v244 = vadd.f32 %v238, %v243
    %v245 = vadd.f32 %v239, %v243
    %v246 = vadd.f32 %v240, %v243
    %v247 = vadd.f32 %v241, %v243
    %v248 = vtanh.pop %v244
    %v249 = vtanh.pop %v245
    %v250 = vtanh.pop %v246
    %v251 = vtanh.pop %v247
    %s252 = sld [smem:[#allocation9 + $0x6]]
    %v253 = vstv %s252
    %v254 = vmul.f32 %v248, %v253
    %v255 = vmul.f32 %v249, %v253
    %v256 = vmul.f32 %v250, %v253
    %v257 = vmul.f32 %v251, %v253
    %v258 = vadd.f32 %v232, %v254
    %v259 = vadd.f32 %v233, %v255
    %v260 = vadd.f32 %v234, %v256
    %v261 = vadd.f32 %v235, %v257
    %s262 = sld [smem:[#allocation3 + $0x7]]
    %v263 = vstv %s262
    %v264 = vmul.f32 %v74, %v263
    %v265 = vmul.f32 %v75, %v263
    %v266 = vmul.f32 %v76, %v263
    %v267 = vmul.f32 %v77, %v263
    %s268 = sld [smem:[#allocation7 + $0x7]]
    %v269 = vstv %s268
    %v270 = vadd.f32 %v264, %v269
    %v271 = vadd.f32 %v265, %v269
    %v272 = vadd.f32 %v266, %v269
    %v273 = vadd.f32 %v267, %v269
    %v274 = vtanh.pop %v270
    %v275 = vtanh.pop %v271
    %v276 = vtanh.pop %v272
    %v277 = vtanh.pop %v273
    %s278 = sld [smem:[#allocation9 + $0x7]]
    %v279 = vstv %s278
    %v280 = vmul.f32 %v274, %v279
    %v281 = vmul.f32 %v275, %v279
    %v282 = vmul.f32 %v276, %v279
    %v283 = vmul.f32 %v277, %v279
    %v284 = vadd.f32 %v258, %v280
    %v285 = vadd.f32 %v259, %v281
    %v286 = vadd.f32 %v260, %v282
    %v287 = vadd.f32 %v261, %v283
    %s288 = sld [smem:[#allocation3 + $0x8]]
    %v289 = vstv %s288
    %v290 = vmul.f32 %v74, %v289
    %v291 = vmul.f32 %v75, %v289
    %v292 = vmul.f32 %v76, %v289
    %v293 = vmul.f32 %v77, %v289
    %s294 = sld [smem:[#allocation7 + $0x8]]
    %v295 = vstv %s294
    %v296 = vadd.f32 %v290, %v295
    %v297 = vadd.f32 %v291, %v295
    %v298 = vadd.f32 %v292, %v295
    %v299 = vadd.f32 %v293, %v295
    %v300 = vtanh.pop %v296
    %v301 = vtanh.pop %v297
    %v302 = vtanh.pop %v298
    %v303 = vtanh.pop %v299
    %s304 = sld [smem:[#allocation9 + $0x8]]
    %v305 = vstv %s304
    %v306 = vmul.f32 %v300, %v305
    %v307 = vmul.f32 %v301, %v305
    %v308 = vmul.f32 %v302, %v305
    %v309 = vmul.f32 %v303, %v305
    %v310 = vadd.f32 %v284, %v306
    %v311 = vadd.f32 %v285, %v307
    %v312 = vadd.f32 %v286, %v308
    %v313 = vadd.f32 %v287, %v309
    %s314 = sld [smem:[#allocation3 + $0x9]]
    %v315 = vstv %s314
    %v316 = vmul.f32 %v74, %v315
    %v317 = vmul.f32 %v75, %v315
    %v318 = vmul.f32 %v76, %v315
    %v319 = vmul.f32 %v77, %v315
    %s320 = sld [smem:[#allocation7 + $0x9]]
    %v321 = vstv %s320
    %v322 = vadd.f32 %v316, %v321
    %v323 = vadd.f32 %v317, %v321
    %v324 = vadd.f32 %v318, %v321
    %v325 = vadd.f32 %v319, %v321
    %v326 = vtanh.pop %v322
    %v327 = vtanh.pop %v323
    %v328 = vtanh.pop %v324
    %v329 = vtanh.pop %v325
    %s330 = sld [smem:[#allocation9 + $0x9]]
    %v331 = vstv %s330
    %v332 = vmul.f32 %v326, %v331
    %v333 = vmul.f32 %v327, %v331
    %v334 = vmul.f32 %v328, %v331
    %v335 = vmul.f32 %v329, %v331
    %v336 = vadd.f32 %v310, %v332
    %v337 = vadd.f32 %v311, %v333
    %v338 = vadd.f32 %v312, %v334
    %v339 = vadd.f32 %v313, %v335
    %s340 = sld [smem:[#allocation3 + $0xa]]
    %v341 = vstv %s340
    %v342 = vmul.f32 %v74, %v341
    %v343 = vmul.f32 %v75, %v341
    %v344 = vmul.f32 %v76, %v341
    %v345 = vmul.f32 %v77, %v341
    %s346 = sld [smem:[#allocation7 + $0xa]]
    %v347 = vstv %s346
    %v348 = vadd.f32 %v342, %v347
    %v349 = vadd.f32 %v343, %v347
    %v350 = vadd.f32 %v344, %v347
    %v351 = vadd.f32 %v345, %v347
    %v352 = vtanh.pop %v348
    %v353 = vtanh.pop %v349
    %v354 = vtanh.pop %v350
    %v355 = vtanh.pop %v351
    %s356 = sld [smem:[#allocation9 + $0xa]]
    %v357 = vstv %s356
    %v358 = vmul.f32 %v352, %v357
    %v359 = vmul.f32 %v353, %v357
    %v360 = vmul.f32 %v354, %v357
    %v361 = vmul.f32 %v355, %v357
    %v362 = vadd.f32 %v336, %v358
    %v363 = vadd.f32 %v337, %v359
    %v364 = vadd.f32 %v338, %v360
    %v365 = vadd.f32 %v339, %v361
    %s366 = sld [smem:[#allocation3 + $0xb]]
    %v367 = vstv %s366
    %v368 = vmul.f32 %v74, %v367
    %v369 = vmul.f32 %v75, %v367
    %v370 = vmul.f32 %v76, %v367
    %v371 = vmul.f32 %v77, %v367
    %s372 = sld [smem:[#allocation7 + $0xb]]
    %v373 = vstv %s372
    %v374 = vadd.f32 %v368, %v373
    %v375 = vadd.f32 %v369, %v373
    %v376 = vadd.f32 %v370, %v373
    %v377 = vadd.f32 %v371, %v373
    %v378 = vtanh.pop %v374
    %v379 = vtanh.pop %v375
    %v380 = vtanh.pop %v376
    %v381 = vtanh.pop %v377
    %s382 = sld [smem:[#allocation9 + $0xb]]
    %v383 = vstv %s382
    %v384 = vmul.f32 %v378, %v383
    %v385 = vmul.f32 %v379, %v383
    %v386 = vmul.f32 %v380, %v383
    %v387 = vmul.f32 %v381, %v383
    %v388 = vadd.f32 %v362, %v384
    %v389 = vadd.f32 %v363, %v385
    %v390 = vadd.f32 %v364, %v386
    %v391 = vadd.f32 %v365, %v387
    %s392 = sld [smem:[#allocation3 + $0xc]]
    %v393 = vstv %s392
    %v394 = vmul.f32 %v74, %v393
    %v395 = vmul.f32 %v75, %v393
    %v396 = vmul.f32 %v76, %v393
    %v397 = vmul.f32 %v77, %v393
    %s398 = sld [smem:[#allocation7 + $0xc]]
    %v399 = vstv %s398
    %v400 = vadd.f32 %v394, %v399
    %v401 = vadd.f32 %v395, %v399
    %v402 = vadd.f32 %v396, %v399
    %v403 = vadd.f32 %v397, %v399
    %v404 = vtanh.pop %v400
    %v405 = vtanh.pop %v401
    %v406 = vtanh.pop %v402
    %v407 = vtanh.pop %v403
    %s408 = sld [smem:[#allocation9 + $0xc]]
    %v409 = vstv %s408
    %v410 = vmul.f32 %v404, %v409
    %v411 = vmul.f32 %v405, %v409
    %v412 = vmul.f32 %v406, %v409
    %v413 = vmul.f32 %v407, %v409
    %v414 = vadd.f32 %v388, %v410
    %v415 = vadd.f32 %v389, %v411
    %v416 = vadd.f32 %v390, %v412
    %v417 = vadd.f32 %v391, %v413
    %s418 = sld [smem:[#allocation3 + $0xd]]
    %v419 = vstv %s418
    %v420 = vmul.f32 %v74, %v419
    %v421 = vmul.f32 %v75, %v419
    %v422 = vmul.f32 %v76, %v419
    %v423 = vmul.f32 %v77, %v419
    %s424 = sld [smem:[#allocation7 + $0xd]]
    %v425 = vstv %s424
    %v426 = vadd.f32 %v420, %v425
    %v427 = vadd.f32 %v421, %v425
    %v428 = vadd.f32 %v422, %v425
    %v429 = vadd.f32 %v423, %v425
    %v430 = vtanh.pop %v426
    %v431 = vtanh.pop %v427
    %v432 = vtanh.pop %v428
    %v433 = vtanh.pop %v429
    %s434 = sld [smem:[#allocation9 + $0xd]]
    %v435 = vstv %s434
    %v436 = vmul.f32 %v430, %v435
    %v437 = vmul.f32 %v431, %v435
    %v438 = vmul.f32 %v432, %v435
    %v439 = vmul.f32 %v433, %v435
    %v440 = vadd.f32 %v414, %v436
    %v441 = vadd.f32 %v415, %v437
    %v442 = vadd.f32 %v416, %v438
    %v443 = vadd.f32 %v417, %v439
    %s444 = sld [smem:[#allocation3 + $0xe]]
    %v445 = vstv %s444
    %v446 = vmul.f32 %v74, %v445
    %v447 = vmul.f32 %v75, %v445
    %v448 = vmul.f32 %v76, %v445
    %v449 = vmul.f32 %v77, %v445
    %s450 = sld [smem:[#allocation7 + $0xe]]
    %v451 = vstv %s450
    %v452 = vadd.f32 %v446, %v451
    %v453 = vadd.f32 %v447, %v451
    %v454 = vadd.f32 %v448, %v451
    %v455 = vadd.f32 %v449, %v451
    %v456 = vtanh.pop %v452
    %v457 = vtanh.pop %v453
    %v458 = vtanh.pop %v454
    %v459 = vtanh.pop %v455
    %s460 = sld [smem:[#allocation9 + $0xe]]
    %v461 = vstv %s460
    %v462 = vmul.f32 %v456, %v461
    %v463 = vmul.f32 %v457, %v461
    %v464 = vmul.f32 %v458, %v461
    %v465 = vmul.f32 %v459, %v461
    %v466 = vadd.f32 %v440, %v462
    %v467 = vadd.f32 %v441, %v463
    %v468 = vadd.f32 %v442, %v464
    %v469 = vadd.f32 %v443, %v465
    %s470 = sld [smem:[#allocation3 + $0xf]]
    %v471 = vstv %s470
    %v472 = vmul.f32 %v74, %v471
    %v473 = vmul.f32 %v75, %v471
    %v474 = vmul.f32 %v76, %v471
    %v475 = vmul.f32 %v77, %v471
    %s476 = sld [smem:[#allocation7 + $0xf]]
    %v477 = vstv %s476
    %v478 = vadd.f32 %v472, %v477
    %v479 = vadd.f32 %v473, %v477
    %v480 = vadd.f32 %v474, %v477
    %v481 = vadd.f32 %v475, %v477
    %v482 = vtanh.pop %v478
    %v483 = vtanh.pop %v479
    %v484 = vtanh.pop %v480
    %v485 = vtanh.pop %v481
    %s486 = sld [smem:[#allocation9 + $0xf]]
    %v487 = vstv %s486
    %v488 = vmul.f32 %v482, %v487
    %v489 = vmul.f32 %v483, %v487
    %v490 = vmul.f32 %v484, %v487
    %v491 = vmul.f32 %v485, %v487
    %v492 = vadd.f32 %v466, %v488
    %v493 = vadd.f32 %v467, %v489
    %v494 = vadd.f32 %v468, %v490
    %v495 = vadd.f32 %v469, %v491
    %s496 = sld [smem:[#allocation3 + $0x10]]
    %v497 = vstv %s496
    %v498 = vmul.f32 %v74, %v497
    %v499 = vmul.f32 %v75, %v497
    %v500 = vmul.f32 %v76, %v497
    %v501 = vmul.f32 %v77, %v497
    %s502 = sld [smem:[#allocation7 + $0x10]]
    %v503 = vstv %s502
    %v504 = vadd.f32 %v498, %v503
    %v505 = vadd.f32 %v499, %v503
    %v506 = vadd.f32 %v500, %v503
    %v507 = vadd.f32 %v501, %v503
    %v508 = vtanh.pop %v504
    %v509 = vtanh.pop %v505
    %v510 = vtanh.pop %v506
    %v511 = vtanh.pop %v507
    %s512 = sld [smem:[#allocation9 + $0x10]]
    %v513 = vstv %s512
    %v514 = vmul.f32 %v508, %v513
    %v515 = vmul.f32 %v509, %v513
    %v516 = vmul.f32 %v510, %v513
    %v517 = vmul.f32 %v511, %v513
    %v518 = vadd.f32 %v492, %v514
    %v519 = vadd.f32 %v493, %v515
    %v520 = vadd.f32 %v494, %v516
    %v521 = vadd.f32 %v495, %v517
    %s522 = sld [smem:[#allocation3 + $0x11]]
    %v523 = vstv %s522
    %v524 = vmul.f32 %v74, %v523
    %v525 = vmul.f32 %v75, %v523
    %v526 = vmul.f32 %v76, %v523
    %v527 = vmul.f32 %v77, %v523
    %s528 = sld [smem:[#allocation7 + $0x11]]
    %v529 = vstv %s528
    %v530 = vadd.f32 %v524, %v529
    %v531 = vadd.f32 %v525, %v529
    %v532 = vadd.f32 %v526, %v529
    %v533 = vadd.f32 %v527, %v529
    %v534 = vtanh.pop %v530
    %v535 = vtanh.pop %v531
    %v536 = vtanh.pop %v532
    %v537 = vtanh.pop %v533
    %s538 = sld [smem:[#allocation9 + $0x11]]
    %v539 = vstv %s538
    %v540 = vmul.f32 %v534, %v539
    %v541 = vmul.f32 %v535, %v539
    %v542 = vmul.f32 %v536, %v539
    %v543 = vmul.f32 %v537, %v539
    %v544 = vadd.f32 %v518, %v540
    %v545 = vadd.f32 %v519, %v541
    %v546 = vadd.f32 %v520, %v542
    %v547 = vadd.f32 %v521, %v543
    %s548 = sld [smem:[#allocation3 + $0x12]]
    %v549 = vstv %s548
    %v550 = vmul.f32 %v74, %v549
    %v551 = vmul.f32 %v75, %v549
    %v552 = vmul.f32 %v76, %v549
    %v553 = vmul.f32 %v77, %v549
    %s554 = sld [smem:[#allocation7 + $0x12]]
    %v555 = vstv %s554
    %v556 = vadd.f32 %v550, %v555
    %v557 = vadd.f32 %v551, %v555
    %v558 = vadd.f32 %v552, %v555
    %v559 = vadd.f32 %v553, %v555
    %v560 = vtanh.pop %v556
    %v561 = vtanh.pop %v557
    %v562 = vtanh.pop %v558
    %v563 = vtanh.pop %v559
    %s564 = sld [smem:[#allocation9 + $0x12]]
    %v565 = vstv %s564
    %v566 = vmul.f32 %v560, %v565
    %v567 = vmul.f32 %v561, %v565
    %v568 = vmul.f32 %v562, %v565
    %v569 = vmul.f32 %v563, %v565
    %v570 = vadd.f32 %v544, %v566
    %v571 = vadd.f32 %v545, %v567
    %v572 = vadd.f32 %v546, %v568
    %v573 = vadd.f32 %v547, %v569
    %s574 = sld [smem:[#allocation3 + $0x13]]
    %v575 = vstv %s574
    %v576 = vmul.f32 %v74, %v575
    %v577 = vmul.f32 %v75, %v575
    %v578 = vmul.f32 %v76, %v575
    %v579 = vmul.f32 %v77, %v575
    %s580 = sld [smem:[#allocation7 + $0x13]]
    %v581 = vstv %s580
    %v582 = vadd.f32 %v576, %v581
    %v583 = vadd.f32 %v577, %v581
    %v584 = vadd.f32 %v578, %v581
    %v585 = vadd.f32 %v579, %v581
    %v586 = vtanh.pop %v582
    %v587 = vtanh.pop %v583
    %v588 = vtanh.pop %v584
    %v589 = vtanh.pop %v585
    %s590 = sld [smem:[#allocation9 + $0x13]]
    %v591 = vstv %s590
    %v592 = vmul.f32 %v586, %v591
    %v593 = vmul.f32 %v587, %v591
    %v594 = vmul.f32 %v588, %v591
    %v595 = vmul.f32 %v589, %v591
    %v596 = vadd.f32 %v570, %v592
    %v597 = vadd.f32 %v571, %v593
    %v598 = vadd.f32 %v572, %v594
    %v599 = vadd.f32 %v573, %v595
    %s600 = sld [smem:[#allocation3 + $0x14]]
    %v601 = vstv %s600
    %v602 = vmul.f32 %v74, %v601
    %v603 = vmul.f32 %v75, %v601
    %v604 = vmul.f32 %v76, %v601
    %v605 = vmul.f32 %v77, %v601
    %s606 = sld [smem:[#allocation7 + $0x14]]
    %v607 = vstv %s606
    %v608 = vadd.f32 %v602, %v607
    %v609 = vadd.f32 %v603, %v607
    %v610 = vadd.f32 %v604, %v607
    %v611 = vadd.f32 %v605, %v607
    %v612 = vtanh.pop %v608
    %v613 = vtanh.pop %v609
    %v614 = vtanh.pop %v610
    %v615 = vtanh.pop %v611
    %s616 = sld [smem:[#allocation9 + $0x14]]
    %v617 = vstv %s616
    %v618 = vmul.f32 %v612, %v617
    %v619 = vmul.f32 %v613, %v617
    %v620 = vmul.f32 %v614, %v617
    %v621 = vmul.f32 %v615, %v617
    %v622 = vadd.f32 %v596, %v618
    %v623 = vadd.f32 %v597, %v619
    %v624 = vadd.f32 %v598, %v620
    %v625 = vadd.f32 %v599, %v621
    %s626 = sld [smem:[#allocation3 + $0x15]]
    %v627 = vstv %s626
    %v628 = vmul.f32 %v74, %v627
    %v629 = vmul.f32 %v75, %v627
    %v630 = vmul.f32 %v76, %v627
    %v631 = vmul.f32 %v77, %v627
    %s632 = sld [smem:[#allocation7 + $0x15]]
    %v633 = vstv %s632
    %v634 = vadd.f32 %v628, %v633
    %v635 = vadd.f32 %v629, %v633
    %v636 = vadd.f32 %v630, %v633
    %v637 = vadd.f32 %v631, %v633
    %v638 = vtanh.pop %v634
    %v639 = vtanh.pop %v635
    %v640 = vtanh.pop %v636
    %v641 = vtanh.pop %v637
    %s642 = sld [smem:[#allocation9 + $0x15]]
    %v643 = vstv %s642
    %v644 = vmul.f32 %v638, %v643
    %v645 = vmul.f32 %v639, %v643
    %v646 = vmul.f32 %v640, %v643
    %v647 = vmul.f32 %v641, %v643
    %v648 = vadd.f32 %v622, %v644
    %v649 = vadd.f32 %v623, %v645
    %v650 = vadd.f32 %v624, %v646
    %v651 = vadd.f32 %v625, %v647
    %s652 = sld [smem:[#allocation3 + $0x16]]
    %v653 = vstv %s652
    %v654 = vmul.f32 %v74, %v653
    %v655 = vmul.f32 %v75, %v653
    %v656 = vmul.f32 %v76, %v653
    %v657 = vmul.f32 %v77, %v653
    %s658 = sld [smem:[#allocation7 + $0x16]]
    %v659 = vstv %s658
    %v660 = vadd.f32 %v654, %v659
    %v661 = vadd.f32 %v655, %v659
    %v662 = vadd.f32 %v656, %v659
    %v663 = vadd.f32 %v657, %v659
    %v664 = vtanh.pop %v660
    %v665 = vtanh.pop %v661
    %v666 = vtanh.pop %v662
    %v667 = vtanh.pop %v663
    %s668 = sld [smem:[#allocation9 + $0x16]]
    %v669 = vstv %s668
    %v670 = vmul.f32 %v664, %v669
    %v671 = vmul.f32 %v665, %v669
    %v672 = vmul.f32 %v666, %v669
    %v673 = vmul.f32 %v667, %v669
    %v674 = vadd.f32 %v648, %v670
    %v675 = vadd.f32 %v649, %v671
    %v676 = vadd.f32 %v650, %v672
    %v677 = vadd.f32 %v651, %v673
    %s678 = sld [smem:[#allocation3 + $0x17]]
    %v679 = vstv %s678
    %v680 = vmul.f32 %v74, %v679
    %v681 = vmul.f32 %v75, %v679
    %v682 = vmul.f32 %v76, %v679
    %v683 = vmul.f32 %v77, %v679
    %s684 = sld [smem:[#allocation7 + $0x17]]
    %v685 = vstv %s684
    %v686 = vadd.f32 %v680, %v685
    %v687 = vadd.f32 %v681, %v685
    %v688 = vadd.f32 %v682, %v685
    %v689 = vadd.f32 %v683, %v685
    %v690 = vtanh.pop %v686
    %v691 = vtanh.pop %v687
    %v692 = vtanh.pop %v688
    %v693 = vtanh.pop %v689
    %s694 = sld [smem:[#allocation9 + $0x17]]
    %v695 = vstv %s694
    %v696 = vmul.f32 %v690, %v695
    %v697 = vmul.f32 %v691, %v695
    %v698 = vmul.f32 %v692, %v695
    %v699 = vmul.f32 %v693, %v695
    %v700 = vadd.f32 %v674, %v696
    %v701 = vadd.f32 %v675, %v697
    %v702 = vadd.f32 %v676, %v698
    %v703 = vadd.f32 %v677, %v699
    %s704 = sld [smem:[#allocation3 + $0x18]]
    %v705 = vstv %s704
    %v706 = vmul.f32 %v74, %v705
    %v707 = vmul.f32 %v75, %v705
    %v708 = vmul.f32 %v76, %v705
    %v709 = vmul.f32 %v77, %v705
    %s710 = sld [smem:[#allocation7 + $0x18]]
    %v711 = vstv %s710
    %v712 = vadd.f32 %v706, %v711
    %v713 = vadd.f32 %v707, %v711
    %v714 = vadd.f32 %v708, %v711
    %v715 = vadd.f32 %v709, %v711
    %v716 = vtanh.pop %v712
    %v717 = vtanh.pop %v713
    %v718 = vtanh.pop %v714
    %v719 = vtanh.pop %v715
    %s720 = sld [smem:[#allocation9 + $0x18]]
    %v721 = vstv %s720
    %v722 = vmul.f32 %v716, %v721
    %v723 = vmul.f32 %v717, %v721
    %v724 = vmul.f32 %v718, %v721
    %v725 = vmul.f32 %v719, %v721
    %v726 = vadd.f32 %v700, %v722
    %v727 = vadd.f32 %v701, %v723
    %v728 = vadd.f32 %v702, %v724
    %v729 = vadd.f32 %v703, %v725
    %s730 = sld [smem:[#allocation3 + $0x19]]
    %v731 = vstv %s730
    %v732 = vmul.f32 %v74, %v731
    %v733 = vmul.f32 %v75, %v731
    %v734 = vmul.f32 %v76, %v731
    %v735 = vmul.f32 %v77, %v731
    %s736 = sld [smem:[#allocation7 + $0x19]]
    %v737 = vstv %s736
    %v738 = vadd.f32 %v732, %v737
    %v739 = vadd.f32 %v733, %v737
    %v740 = vadd.f32 %v734, %v737
    %v741 = vadd.f32 %v735, %v737
    %v742 = vtanh.pop %v738
    %v743 = vtanh.pop %v739
    %v744 = vtanh.pop %v740
    %v745 = vtanh.pop %v741
    %s746 = sld [smem:[#allocation9 + $0x19]]
    %v747 = vstv %s746
    %v748 = vmul.f32 %v742, %v747
    %v749 = vmul.f32 %v743, %v747
    %v750 = vmul.f32 %v744, %v747
    %v751 = vmul.f32 %v745, %v747
    %v752 = vadd.f32 %v726, %v748
    %v753 = vadd.f32 %v727, %v749
    %v754 = vadd.f32 %v728, %v750
    %v755 = vadd.f32 %v729, %v751
    %s756 = sld [smem:[#allocation3 + $0x1a]]
    %v757 = vstv %s756
    %v758 = vmul.f32 %v74, %v757
    %v759 = vmul.f32 %v75, %v757
    %v760 = vmul.f32 %v76, %v757
    %v761 = vmul.f32 %v77, %v757
    %s762 = sld [smem:[#allocation7 + $0x1a]]
    %v763 = vstv %s762
    %v764 = vadd.f32 %v758, %v763
    %v765 = vadd.f32 %v759, %v763
    %v766 = vadd.f32 %v760, %v763
    %v767 = vadd.f32 %v761, %v763
    %v768 = vtanh.pop %v764
    %v769 = vtanh.pop %v765
    %v770 = vtanh.pop %v766
    %v771 = vtanh.pop %v767
    %s772 = sld [smem:[#allocation9 + $0x1a]]
    %v773 = vstv %s772
    %v774 = vmul.f32 %v768, %v773
    %v775 = vmul.f32 %v769, %v773
    %v776 = vmul.f32 %v770, %v773
    %v777 = vmul.f32 %v771, %v773
    %v778 = vadd.f32 %v752, %v774
    %v779 = vadd.f32 %v753, %v775
    %v780 = vadd.f32 %v754, %v776
    %v781 = vadd.f32 %v755, %v777
    %s782 = sld [smem:[#allocation3 + $0x1b]]
    %v783 = vstv %s782
    %v784 = vmul.f32 %v74, %v783
    %v785 = vmul.f32 %v75, %v783
    %v786 = vmul.f32 %v76, %v783
    %v787 = vmul.f32 %v77, %v783
    %s788 = sld [smem:[#allocation7 + $0x1b]]
    %v789 = vstv %s788
    %v790 = vadd.f32 %v784, %v789
    %v791 = vadd.f32 %v785, %v789
    %v792 = vadd.f32 %v786, %v789
    %v793 = vadd.f32 %v787, %v789
    %v794 = vtanh.pop %v790
    %v795 = vtanh.pop %v791
    %v796 = vtanh.pop %v792
    %v797 = vtanh.pop %v793
    %s798 = sld [smem:[#allocation9 + $0x1b]]
    %v799 = vstv %s798
    %v800 = vmul.f32 %v794, %v799
    %v801 = vmul.f32 %v795, %v799
    %v802 = vmul.f32 %v796, %v799
    %v803 = vmul.f32 %v797, %v799
    %v804 = vadd.f32 %v778, %v800
    %v805 = vadd.f32 %v779, %v801
    %v806 = vadd.f32 %v780, %v802
    %v807 = vadd.f32 %v781, %v803
    %s808 = sld [smem:[#allocation3 + $0x1c]]
    %v809 = vstv %s808
    %v810 = vmul.f32 %v74, %v809
    %v811 = vmul.f32 %v75, %v809
    %v812 = vmul.f32 %v76, %v809
    %v813 = vmul.f32 %v77, %v809
    %s814 = sld [smem:[#allocation7 + $0x1c]]
    %v815 = vstv %s814
    %v816 = vadd.f32 %v810, %v815
    %v817 = vadd.f32 %v811, %v815
    %v818 = vadd.f32 %v812, %v815
    %v819 = vadd.f32 %v813, %v815
    %v820 = vtanh.pop %v816
    %v821 = vtanh.pop %v817
    %v822 = vtanh.pop %v818
    %v823 = vtanh.pop %v819
    %s824 = sld [smem:[#allocation9 + $0x1c]]
    %v825 = vstv %s824
    %v826 = vmul.f32 %v820, %v825
    %v827 = vmul.f32 %v821, %v825
    %v828 = vmul.f32 %v822, %v825
    %v829 = vmul.f32 %v823, %v825
    %v830 = vadd.f32 %v804, %v826
    %v831 = vadd.f32 %v805, %v827
    %v832 = vadd.f32 %v806, %v828
    %v833 = vadd.f32 %v807, %v829
    %s834 = sld [smem:[#allocation3 + $0x1d]]
    %v835 = vstv %s834
    %v836 = vmul.f32 %v74, %v835
    %v837 = vmul.f32 %v75, %v835
    %v838 = vmul.f32 %v76, %v835
    %v839 = vmul.f32 %v77, %v835
    %s840 = sld [smem:[#allocation7 + $0x1d]]
    %v841 = vstv %s840
    %v842 = vadd.f32 %v836, %v841
    %v843 = vadd.f32 %v837, %v841
    %v844 = vadd.f32 %v838, %v841
    %v845 = vadd.f32 %v839, %v841
    %v846 = vtanh.pop %v842
    %v847 = vtanh.pop %v843
    %v848 = vtanh.pop %v844
    %v849 = vtanh.pop %v845
    %s850 = sld [smem:[#allocation9 + $0x1d]]
    %v851 = vstv %s850
    %v852 = vmul.f32 %v846, %v851
    %v853 = vmul.f32 %v847, %v851
    %v854 = vmul.f32 %v848, %v851
    %v855 = vmul.f32 %v849, %v851
    %v856 = vadd.f32 %v830, %v852
    %v857 = vadd.f32 %v831, %v853
    %v858 = vadd.f32 %v832, %v854
    %v859 = vadd.f32 %v833, %v855
    %s860 = sld [smem:[#allocation3 + $0x1e]]
    %v861 = vstv %s860
    %v862 = vmul.f32 %v74, %v861
    %v863 = vmul.f32 %v75, %v861
    %v864 = vmul.f32 %v76, %v861
    %v865 = vmul.f32 %v77, %v861
    %s866 = sld [smem:[#allocation7 + $0x1e]]
    %v867 = vstv %s866
    %v868 = vadd.f32 %v862, %v867
    %v869 = vadd.f32 %v863, %v867
    %v870 = vadd.f32 %v864, %v867
    %v871 = vadd.f32 %v865, %v867
    %v872 = vtanh.pop %v868
    %v873 = vtanh.pop %v869
    %v874 = vtanh.pop %v870
    %v875 = vtanh.pop %v871
    %s876 = sld [smem:[#allocation9 + $0x1e]]
    %v877 = vstv %s876
    %v878 = vmul.f32 %v872, %v877
    %v879 = vmul.f32 %v873, %v877
    %v880 = vmul.f32 %v874, %v877
    %v881 = vmul.f32 %v875, %v877
    %v882 = vadd.f32 %v856, %v878
    %v883 = vadd.f32 %v857, %v879
    %v884 = vadd.f32 %v858, %v880
    %v885 = vadd.f32 %v859, %v881
    %s886 = sld [smem:[#allocation3 + $0x1f]]
    %v887 = vstv %s886
    %v888 = vmul.f32 %v74, %v887
    %v889 = vmul.f32 %v75, %v887
    %v890 = vmul.f32 %v76, %v887
    %v891 = vmul.f32 %v77, %v887
    %s892 = sld [smem:[#allocation7 + $0x1f]]
    %v893 = vstv %s892
    %v894 = vadd.f32 %v888, %v893
    %v895 = vadd.f32 %v889, %v893
    %v896 = vadd.f32 %v890, %v893
    %v897 = vadd.f32 %v891, %v893
    %v898 = vtanh.pop %v894
    %v899 = vtanh.pop %v895
    %v900 = vtanh.pop %v896
    %v901 = vtanh.pop %v897
    %s902 = sld [smem:[#allocation9 + $0x1f]]
    %v903 = vstv %s902
    %v904 = vmul.f32 %v898, %v903
    %v905 = vmul.f32 %v899, %v903
    %v906 = vmul.f32 %v900, %v903
    %v907 = vmul.f32 %v901, %v903
    %v908 = vadd.f32 %v882, %v904
    %v909 = vadd.f32 %v883, %v905
    %v910 = vadd.f32 %v884, %v906
    %v911 = vadd.f32 %v885, %v907
    %v912 = vmul.f32 %v908, 1.442695
    %v913 = vpow.pop %v912
    %v914 = vmul.f32 %v909, 1.442695
    %v915 = vpow.pop %v914
    %v916 = vmul.f32 %v910, 1.442695
    %v917 = vpow.pop %v916
    %v918 = vmul.f32 %v911, 1.442695
    %v919 = vpow.pop %v918
    %920 = vst [vmem:[#allocation11] sm:$0xff] %v913
    %921 = vst [vmem:[#allocation11 + $0x8] sm:$0xff] %v915
    %922 = vst [vmem:[#allocation11 + $0x10] sm:$0xff] %v917
    %923 = vst [vmem:[#allocation11 + $0x18] sm:$0xff] %v919
    // Predicated region
    $region38: #{tpu_custom_call.1} parent=1 // pred_check
      _
    $region39: #{tpu_custom_call.1} parent=1 // pred_check_branch
      %925 = sbr.rel (0) target = $region41
    $region40: #{tpu_custom_call.1} parent=1 // pred_region
      %927 = vsyncadd [#allocation5], 0
      %s928 = sshll.u32 [#allocation11], 4
      %s929 = int_to_ptr.vmem [resolvable:$true] %s928
      %s930 = sshll.u32 %s5, 4
      %s931 = int_to_ptr.hbm [resolvable:$true] %s930
      %936 = dma.vmem_to_hbm [thread:$0]  %s929, 512, %s931, [#allocation5], 128, 128, 8
    $region41: #{tpu_custom_call.1} parent=1 // pred_fallthru
      _
    // Predicated region
    $region42: #{tpu_custom_call.1} parent=1 // pred_check
      _
    $region43: #{tpu_custom_call.1} parent=1 // pred_check_branch
      %938 = sbr.rel (0) target = $region45
    $region44: #{tpu_custom_call.1} parent=1 // pred_region
      %940 = dma.done [#allocation5], 512
    $region45: #{tpu_custom_call.1} parent=1 // pred_fallthru
      _
    %941 = vsyncpa [#allocation4], 1
    %942 = vsyncpa [#allocation5], 1
    %943 = vsyncpa [#allocation6], 1
    %944 = vsyncpa [#allocation8], 1

</llo_original>
